<compile_context>
chip_gen: v7x
topology: tpu7x:2x2x1
jax: 0.10.0
libtpu: 0.0.40
codegen_flags: <defaults>
</compile_context>

<pallas_src>
import functools

import jax
import jax.numpy as jnp
from jax.experimental import pallas as pl
from jax.experimental.pallas import tpu as pltpu

MIN_STDDEV = 0.1


def _round_up(x, m):
    return ((x + m - 1) // m) * m


# ----------------------------------------------------------------------------
# Kernel
# ----------------------------------------------------------------------------
def transition_kernel(
    # activations
    x_ref,      # (B, S)        state s_t
    h_ref,      # (B, Hp)       rnn hidden h_t, zero-padded to Hp lanes
    e_ref,      # (B, O)        embedded next obs
    # fused GRU weights (lane-aligned gate blocks [r | z | i_n | h_n], each Hp wide)
    w_gx_ref,   # (S,  4*Hp)
    w_gh_ref,   # (Hp, 4*Hp)
    b_g_ref,    # (1,  4*Hp)    r/z biases pre-summed (b_ih + b_hh)
    # posterior obs-embedding Linear, split over the concat (no in-kernel concat needed)
    w_oh_ref,   # (Hp, Hp)
    w_oe_ref,   # (O,  Hp)
    b_o_ref,    # (1,  Hp)
    # fused heads: one lane-dense slab [prior_mean | post_mean | prior_std | post_std]
    w_ph_ref,   # (Hp, OUT)     columns fed from h_{t+1}
    w_qh_ref,   # (Hp, OUT)     columns fed from posterior hidden
    b_hd_ref,   # (1,  OUT)
    # outputs
    heads_ref,  # (B, OUT)      packed head slab (lane-dense)
    new_h_ref,  # (B, Hp)       new rnn hidden (padded, lane-dense)
):
    S = x_ref.shape[-1]
    Hp = h_ref.shape[-1]
    cdt = w_gx_ref.dtype  # compute dtype fed to the MXU (f32 or bf16)

    x = x_ref[...]
    h = h_ref[...]
    e = e_ref[...]

    # ---- GRUCell (PyTorch gate order r, z, n), all slices 128-lane aligned ----
    g = (
        jnp.dot(x, w_gx_ref[...], preferred_element_type=jnp.float32)
        + jnp.dot(h, w_gh_ref[...], preferred_element_type=jnp.float32)
        + b_g_ref[...].astype(jnp.float32)
    )  # (B, 4*Hp) f32
    rz = jax.nn.sigmoid(g[:, : 2 * Hp])
    r = rz[:, :Hp]
    z = rz[:, Hp: 2 * Hp]
    n = jnp.tanh(g[:, 2 * Hp: 3 * Hp] + r * g[:, 3 * Hp: 4 * Hp])
    h_new = (1.0 - z) * n + z * h.astype(jnp.float32)          # (B, Hp), pad lanes stay 0
    new_h_ref[...] = h_new.astype(new_h_ref.dtype)

    h_new_c = h_new.astype(cdt)

    # ---- posterior hidden: Linear(cat([h_{t+1}, e])) == h@W_h + e@W_e + b ----
    hid = (
        jnp.dot(h_new_c, w_oh_ref[...], preferred_element_type=jnp.float32)
        + jnp.dot(e, w_oe_ref[...], preferred_element_type=jnp.float32)
        + b_o_ref[...].astype(jnp.float32)
    )  # (B, Hp) f32

    # ---- fused prior + posterior heads into one lane-dense slab ----
    heads = (
        jnp.dot(h_new_c, w_ph_ref[...], preferred_element_type=jnp.float32)
        + jnp.dot(hid.astype(cdt), w_qh_ref[...], preferred_element_type=jnp.float32)
        + b_hd_ref[...].astype(jnp.float32)
    )  # (B, OUT) f32
    # softplus + min_stddev only on the stddev half (lanes >= 2*S); full-vreg select,
    # no sub-128-lane slicing inside the kernel.
    lane = jax.lax.broadcasted_iota(jnp.int32, heads.shape, dimension=1)
    softplus = jnp.logaddexp(heads, 0.0)  # == F.softplus, numerically stable
    heads = jnp.where(lane >= 2 * S, softplus + MIN_STDDEV, heads)
    heads_ref[...] = heads.astype(heads_ref.dtype)


# ----------------------------------------------------------------------------
# Wrapper
# ----------------------------------------------------------------------------
def simple_transition_forward(state, rnn_hidden, embedded_next_obs, packed):
    """Fused transition step.

    Returns ((prior_mean, prior_std), (post_mean, post_std), new_rnn_hidden).
    """
    B, S = state.shape
    H = rnn_hidden.shape[-1]
    Hp = packed["w_oh"].shape[0]
    OUT = packed["w_ph"].shape[1]
    cdt = packed["w_gx"].dtype

    x = state.astype(cdt)
    h = jnp.pad(rnn_hidden, ((0, 0), (0, Hp - H))).astype(cdt)
    e = embedded_next_obs.astype(cdt)

    vmem = pl.BlockSpec(memory_space=pltpu.MemorySpace.VMEM)
    heads, new_h_pad = pl.pallas_call(
        transition_kernel,
        out_shape=(
            jax.ShapeDtypeStruct((B, OUT), jnp.float32),
            jax.ShapeDtypeStruct((B, Hp), jnp.float32),
        ),
        in_specs=[vmem] * 12,
        out_specs=(vmem, vmem),
    )(
        x, h, e,
        packed["w_gx"], packed["w_gh"], packed["b_g"],
        packed["w_oh"], packed["w_oe"], packed["b_o"],
        packed["w_ph"], packed["w_qh"], packed["b_hd"],
    )

    prior_mean = heads[:, 0:S]
    post_mean = heads[:, S:2 * S]
    prior_std = heads[:, 2 * S:3 * S]
    post_std = heads[:, 3 * S:4 * S]
    new_h = new_h_pad[:, :H]
    return (prior_mean, prior_std), (post_mean, post_std), new_h


# ----------------------------------------------------------------------------
# Parameter handling
# ----------------------------------------------------------------------------
def init_raw_params(key, state_dim, rnn_hidden_dim, obs_dim):
    """PyTorch-shaped params (weights pre-transposed to (in, out), 1-D biases)."""
    S, H, O = state_dim, rnn_hidden_dim, obs_dim
    ks = jax.random.split(key, 14)

    def lin(kw, kb, fan_in, fan_out):
        bound = 1.0 / jnp.sqrt(fan_in)
        w = jax.random.uniform(kw, (fan_in, fan_out), jnp.float32, -bound, bound)
        b = jax.random.uniform(kb, (fan_out,), jnp.float32, -bound, bound)
        return w, b

    w_ih, b_ih = lin(ks[0], ks[1], S, 3 * H)        # GRU input weights (gate order r,z,n)
    w_hh, b_hh = lin(ks[2], ks[3], H, 3 * H)        # GRU hidden weights
    w_mp, b_mp = lin(ks[4], ks[5], H, S)            # prior mean
    w_sp, b_sp = lin(ks[6], ks[7], H, S)            # prior stddev (pre-softplus)
    w_o, b_o = lin(ks[8], ks[9], H + O, H)          # posterior obs-embedding Linear
    w_mq, b_mq = lin(ks[10], ks[11], H, S)          # posterior mean
    w_sq, b_sq = lin(ks[12], ks[13], H, S)          # posterior stddev (pre-softplus)

    return dict(
        w_ih=w_ih, b_ih=b_ih, w_hh=w_hh, b_hh=b_hh,
        w_mp=w_mp, b_mp=b_mp, w_sp=w_sp, b_sp=b_sp,
        w_o=w_o, b_o=b_o,
        w_mq=w_mq, b_mq=b_mq, w_sq=w_sq, b_sq=b_sq,
    )


def pack_params(raw, state_dim, rnn_hidden_dim, obs_dim, param_dtype=jnp.float32):
    """Pack raw params into lane-aligned, fused layouts for the kernel.

    param_dtype=jnp.bfloat16 halves weight bytes / doubles MXU rate on v6e/v7x;
    biases are kept f32 (added after the f32-accumulated matmul).
    """
    S, H, O = state_dim, rnn_hidden_dim, obs_dim
    Hp = _round_up(H, 128)
    OUT = _round_up(4 * S, 128)
    f32 = jnp.float32

    w_ih, b_ih = raw["w_ih"], raw["b_ih"]
    w_hh, b_hh = raw["w_hh"], raw["b_hh"]

    # GRU: column blocks [r | z | i_n | h_n], each Hp lanes wide.
    w_gx = jnp.zeros((S, 4 * Hp), f32)
    w_gx = w_gx.at[:, 0:H].set(w_ih[:, 0:H])
    w_gx = w_gx.at[:, Hp:Hp + H].set(w_ih[:, H:2 * H])
    w_gx = w_gx.at[:, 2 * Hp:2 * Hp + H].set(w_ih[:, 2 * H:3 * H])

    w_gh = jnp.zeros((Hp, 4 * Hp), f32)
    w_gh = w_gh.at[:H, 0:H].set(w_hh[:, 0:H])
    w_gh = w_gh.at[:H, Hp:Hp + H].set(w_hh[:, H:2 * H])
    w_gh = w_gh.at[:H, 3 * Hp:3 * Hp + H].set(w_hh[:, 2 * H:3 * H])

    b_g = jnp.zeros((1, 4 * Hp), f32)
    b_g = b_g.at[0, 0:H].set(b_ih[0:H] + b_hh[0:H])                    # r bias pre-summed
    b_g = b_g.at[0, Hp:Hp + H].set(b_ih[H:2 * H] + b_hh[H:2 * H])      # z bias pre-summed
    b_g = b_g.at[0, 2 * Hp:2 * Hp + H].set(b_ih[2 * H:3 * H])          # i_n bias
    b_g = b_g.at[0, 3 * Hp:3 * Hp + H].set(b_hh[2 * H:3 * H])          # h_n bias

    # posterior obs-embedding Linear over cat([h, e]) split into h / e parts, padded.
    w_o, b_o = raw["w_o"], raw["b_o"]
    w_oh = jnp.zeros((Hp, Hp), f32).at[:H, :H].set(w_o[:H, :])
    w_oe = jnp.zeros((O, Hp), f32).at[:, :H].set(w_o[H:, :])
    b_o_p = jnp.zeros((1, Hp), f32).at[0, :H].set(b_o)

    # fused heads: slab columns [prior_mean | post_mean | prior_std | post_std | pad]
    w_ph = jnp.zeros((Hp, OUT), f32)          # fed from h_{t+1}
    w_ph = w_ph.at[:H, 0:S].set(raw["w_mp"])
    w_ph = w_ph.at[:H, 2 * S:3 * S].set(raw["w_sp"])
    w_qh = jnp.zeros((Hp, OUT), f32)          # fed from posterior hidden
    w_qh = w_qh.at[:H, S:2 * S].set(raw["w_mq"])
    w_qh = w_qh.at[:H, 3 * S:4 * S].set(raw["w_sq"])
    b_hd = jnp.zeros((1, OUT), f32)
    b_hd = b_hd.at[0, 0:S].set(raw["b_mp"])
    b_hd = b_hd.at[0, S:2 * S].set(raw["b_mq"])
    b_hd = b_hd.at[0, 2 * S:3 * S].set(raw["b_sp"])
    b_hd = b_hd.at[0, 3 * S:4 * S].set(raw["b_sq"])

    return dict(
        w_gx=w_gx.astype(param_dtype), w_gh=w_gh.astype(param_dtype), b_g=b_g,
        w_oh=w_oh.astype(param_dtype), w_oe=w_oe.astype(param_dtype), b_o=b_o_p,
        w_ph=w_ph.astype(param_dtype), w_qh=w_qh.astype(param_dtype), b_hd=b_hd,
    )


# ----------------------------------------------------------------------------
# Pure-JAX reference (mirrors the PyTorch module exactly)
# ----------------------------------------------------------------------------
def reference_forward(state, h, e, raw):
    H = h.shape[-1]
    gi = state @ raw["w_ih"] + raw["b_ih"]
    gh = h @ raw["w_hh"] + raw["b_hh"]
    i_r, i_z, i_n = gi[:, :H], gi[:, H:2 * H], gi[:, 2 * H:]
    h_r, h_z, h_n = gh[:, :H], gh[:, H:2 * H], gh[:, 2 * H:]
    r = jax.nn.sigmoid(i_r + h_r)
    z = jax.nn.sigmoid(i_z + h_z)
    n = jnp.tanh(i_n + r * h_n)
    h_new = (1.0 - z) * n + z * h
    prior_mean = h_new @ raw["w_mp"] + raw["b_mp"]
    prior_std = jax.nn.softplus(h_new @ raw["w_sp"] + raw["b_sp"]) + MIN_STDDEV
    hid = jnp.concatenate([h_new, e], axis=-1) @ raw["w_o"] + raw["b_o"]
    post_mean = hid @ raw["w_mq"] + raw["b_mq"]
    post_std = jax.nn.softplus(hid @ raw["w_sq"] + raw["b_sq"]) + MIN_STDDEV
    return (prior_mean, prior_std), (post_mean, post_std), h_new


# ----------------------------------------------------------------------------
if __name__ == "__main__":
    B = 8            # batch
    STATE_DIM = 32
    RNN_HIDDEN = 64
    OBS_DIM = 128

    key = jax.random.PRNGKey(0)
    k_p, k_s, k_h, k_e = jax.random.split(key, 4)

    raw = init_raw_params(k_p, STATE_DIM, RNN_HIDDEN, OBS_DIM)
    state = jax.random.normal(k_s, (B, STATE_DIM), jnp.float32)
    rnn_hidden = jax.random.normal(k_h, (B, RNN_HIDDEN), jnp.float32)
    embedded_next_obs = jax.random.normal(k_e, (B, OBS_DIM), jnp.float32)

    # --- f32 path (reference-accurate) ---
    packed_f32 = pack_params(raw, STATE_DIM, RNN_HIDDEN, OBS_DIM, jnp.float32)
    (pm, ps), (qm, qs), new_h = jax.block_until_ready(
        simple_transition_forward(state, rnn_hidden, embedded_next_obs, packed_f32)
    )
    (pm_r, ps_r), (qm_r, qs_r), h_r = reference_forward(state, rnn_hidden, embedded_next_obs, raw)

    assert pm.shape == (B, STATE_DIM) and ps.shape == (B, STATE_DIM)
    assert qm.shape == (B, STATE_DIM) and qs.shape == (B, STATE_DIM)
    assert new_h.shape == (B, RNN_HIDDEN)
    for got, want in ((pm, pm_r), (ps, ps_r), (qm, qm_r), (qs, qs_r), (new_h, h_r)):
        assert jnp.allclose(got, want, atol=1e-4, rtol=1e-4), float(jnp.max(jnp.abs(got - want)))
    assert bool(jnp.all(ps >= MIN_STDDEV - 1e-6)) and bool(jnp.all(qs >= MIN_STDDEV - 1e-6))

    # --- bf16 weights/activations (v6e/v7x fast path): execution sanity only ---
    packed_bf16 = pack_params(raw, STATE_DIM, RNN_HIDDEN, OBS_DIM, jnp.bfloat16)
    (pm_b, ps_b), (qm_b, qs_b), new_h_b = jax.block_until_ready(
        simple_transition_forward(state, rnn_hidden, embedded_next_obs, packed_bf16)
    )
    assert pm_b.shape == (B, STATE_DIM) and new_h_b.shape == (B, RNN_HIDDEN)

    print("KERNEL_OK")
</pallas_src>

<mosaic_0001>
module attributes {stable_mosaic.version = 11 : i64} {
  func.func @transition_kernel(%arg0: memref<8x32xf32, #tpu.memory_space<vmem>>, %arg1: memref<8x128xf32, #tpu.memory_space<vmem>>, %arg2: memref<8x128xf32, #tpu.memory_space<vmem>>, %arg3: memref<32x512xf32, #tpu.memory_space<vmem>>, %arg4: memref<128x512xf32, #tpu.memory_space<vmem>>, %arg5: memref<1x512xf32, #tpu.memory_space<vmem>>, %arg6: memref<128x128xf32, #tpu.memory_space<vmem>>, %arg7: memref<128x128xf32, #tpu.memory_space<vmem>>, %arg8: memref<1x128xf32, #tpu.memory_space<vmem>>, %arg9: memref<128x128xf32, #tpu.memory_space<vmem>>, %arg10: memref<128x128xf32, #tpu.memory_space<vmem>>, %arg11: memref<1x128xf32, #tpu.memory_space<vmem>>, %arg12: memref<8x128xf32, #tpu.memory_space<vmem>>, %arg13: memref<8x128xf32, #tpu.memory_space<vmem>>) attributes {dimension_semantics = [], scalar_prefetch = 0 : i64, scratch_operands = 0 : i64, tpu.core_type = #tpu.core_type<tc>} {
    %c0 = arith.constant 0 : index
    %c0_0 = arith.constant 0 : index
    %0 = vector.load %arg0[%c0, %c0_0] : memref<8x32xf32, #tpu.memory_space<vmem>>, vector<8x32xf32>
    %c0_1 = arith.constant 0 : index
    %c0_2 = arith.constant 0 : index
    %1 = vector.load %arg1[%c0_1, %c0_2] : memref<8x128xf32, #tpu.memory_space<vmem>>, vector<8x128xf32>
    %c0_3 = arith.constant 0 : index
    %c0_4 = arith.constant 0 : index
    %2 = vector.load %arg2[%c0_3, %c0_4] : memref<8x128xf32, #tpu.memory_space<vmem>>, vector<8x128xf32>
    %c0_5 = arith.constant 0 : index
    %c0_6 = arith.constant 0 : index
    %3 = vector.load %arg3[%c0_5, %c0_6] : memref<32x512xf32, #tpu.memory_space<vmem>>, vector<32x512xf32>
    %cst = arith.constant dense<0.000000e+00> : vector<8x512xf32>
    %4 = tpu.matmul %0, %3, %cst {dimension_numbers = #tpu.dot_dimension_numbers<[1], [0], [0], [1], [0, 0, 1, 1], [], []>} : vector<8x32xf32>, vector<32x512xf32>, vector<8x512xf32> -> vector<8x512xf32>
    %c0_7 = arith.constant 0 : index
    %c0_8 = arith.constant 0 : index
    %5 = vector.load %arg4[%c0_7, %c0_8] : memref<128x512xf32, #tpu.memory_space<vmem>>, vector<128x512xf32>
    %cst_9 = arith.constant dense<0.000000e+00> : vector<8x512xf32>
    %6 = tpu.matmul %1, %5, %cst_9 {dimension_numbers = #tpu.dot_dimension_numbers<[1], [0], [0], [1], [0, 0, 1, 1], [], []>} : vector<8x128xf32>, vector<128x512xf32>, vector<8x512xf32> -> vector<8x512xf32>
    %7 = arith.addf %4, %6 : vector<8x512xf32>
    %c0_10 = arith.constant 0 : index
    %c0_11 = arith.constant 0 : index
    %8 = vector.load %arg5[%c0_10, %c0_11] : memref<1x512xf32, #tpu.memory_space<vmem>>, vector<1x512xf32>
    %9 = vector.broadcast %8 : vector<1x512xf32> to vector<8x512xf32>
    %10 = arith.addf %7, %9 : vector<8x512xf32>
    %11 = vector.extract_strided_slice %10 {offsets = [0, 0], sizes = [8, 256], strides = [1, 1]} : vector<8x512xf32> to vector<8x256xf32>
    %12 = arith.negf %11 : vector<8x256xf32>
    %13 = math.exp %12 : vector<8x256xf32>
    %cst_12 = arith.constant 1.000000e+00 : f32
    %14 = vector.broadcast %cst_12 : f32 to vector<8x256xf32>
    %15 = arith.addf %14, %13 : vector<8x256xf32>
    %16 = arith.divf %14, %15 : vector<8x256xf32>
    %17 = vector.extract_strided_slice %16 {offsets = [0, 0], sizes = [8, 128], strides = [1, 1]} : vector<8x256xf32> to vector<8x128xf32>
    %18 = vector.extract_strided_slice %16 {offsets = [0, 128], sizes = [8, 128], strides = [1, 1]} : vector<8x256xf32> to vector<8x128xf32>
    %19 = vector.extract_strided_slice %10 {offsets = [0, 256], sizes = [8, 128], strides = [1, 1]} : vector<8x512xf32> to vector<8x128xf32>
    %20 = vector.extract_strided_slice %10 {offsets = [0, 384], sizes = [8, 128], strides = [1, 1]} : vector<8x512xf32> to vector<8x128xf32>
    %21 = arith.mulf %17, %20 : vector<8x128xf32>
    %22 = arith.addf %19, %21 : vector<8x128xf32>
    %23 = math.tanh %22 : vector<8x128xf32>
    %cst_13 = arith.constant 1.000000e+00 : f32
    %24 = vector.broadcast %cst_13 : f32 to vector<8x128xf32>
    %25 = arith.subf %24, %18 : vector<8x128xf32>
    %26 = arith.mulf %25, %23 : vector<8x128xf32>
    %27 = arith.mulf %18, %1 : vector<8x128xf32>
    %28 = arith.addf %26, %27 : vector<8x128xf32>
    %c0_14 = arith.constant 0 : index
    %c0_15 = arith.constant 0 : index
    %29 = vector.load %arg13[%c0_14, %c0_15] : memref<8x128xf32, #tpu.memory_space<vmem>>, vector<8x128xf32>
    tpu.vector_store %arg13[%c0_14, %c0_15], %28 {strides = array<i32>} : memref<8x128xf32, #tpu.memory_space<vmem>>, vector<8x128xf32>,
    %c0_16 = arith.constant 0 : index
    %c0_17 = arith.constant 0 : index
    %30 = vector.load %arg6[%c0_16, %c0_17] : memref<128x128xf32, #tpu.memory_space<vmem>>, vector<128x128xf32>
    %cst_18 = arith.constant dense<0.000000e+00> : vector<8x128xf32>
    %31 = tpu.matmul %28, %30, %cst_18 {dimension_numbers = #tpu.dot_dimension_numbers<[1], [0], [0], [1], [0, 0, 1, 1], [], []>} : vector<8x128xf32>, vector<128x128xf32>, vector<8x128xf32> -> vector<8x128xf32>
    %c0_19 = arith.constant 0 : index
    %c0_20 = arith.constant 0 : index
    %32 = vector.load %arg7[%c0_19, %c0_20] : memref<128x128xf32, #tpu.memory_space<vmem>>, vector<128x128xf32>
    %cst_21 = arith.constant dense<0.000000e+00> : vector<8x128xf32>
    %33 = tpu.matmul %2, %32, %cst_21 {dimension_numbers = #tpu.dot_dimension_numbers<[1], [0], [0], [1], [0, 0, 1, 1], [], []>} : vector<8x128xf32>, vector<128x128xf32>, vector<8x128xf32> -> vector<8x128xf32>
    %34 = arith.addf %31, %33 : vector<8x128xf32>
    %c0_22 = arith.constant 0 : index
    %c0_23 = arith.constant 0 : index
    %35 = vector.load %arg8[%c0_22, %c0_23] : memref<1x128xf32, #tpu.memory_space<vmem>>, vector<1x128xf32>
    %36 = vector.broadcast %35 : vector<1x128xf32> to vector<8x128xf32>
    %37 = arith.addf %34, %36 : vector<8x128xf32>
    %c0_24 = arith.constant 0 : index
    %c0_25 = arith.constant 0 : index
    %38 = vector.load %arg9[%c0_24, %c0_25] : memref<128x128xf32, #tpu.memory_space<vmem>>, vector<128x128xf32>
    %cst_26 = arith.constant dense<0.000000e+00> : vector<8x128xf32>
    %39 = tpu.matmul %28, %38, %cst_26 {dimension_numbers = #tpu.dot_dimension_numbers<[1], [0], [0], [1], [0, 0, 1, 1], [], []>} : vector<8x128xf32>, vector<128x128xf32>, vector<8x128xf32> -> vector<8x128xf32>
    %c0_27 = arith.constant 0 : index
    %c0_28 = arith.constant 0 : index
    %40 = vector.load %arg10[%c0_27, %c0_28] : memref<128x128xf32, #tpu.memory_space<vmem>>, vector<128x128xf32>
    %cst_29 = arith.constant dense<0.000000e+00> : vector<8x128xf32>
    %41 = tpu.matmul %37, %40, %cst_29 {dimension_numbers = #tpu.dot_dimension_numbers<[1], [0], [0], [1], [0, 0, 1, 1], [], []>} : vector<8x128xf32>, vector<128x128xf32>, vector<8x128xf32> -> vector<8x128xf32>
    %42 = arith.addf %39, %41 : vector<8x128xf32>
    %c0_30 = arith.constant 0 : index
    %c0_31 = arith.constant 0 : index
    %43 = vector.load %arg11[%c0_30, %c0_31] : memref<1x128xf32, #tpu.memory_space<vmem>>, vector<1x128xf32>
    %44 = vector.broadcast %43 : vector<1x128xf32> to vector<8x128xf32>
    %45 = arith.addf %42, %44 : vector<8x128xf32>
    %46 = tpu.iota {dimensions = array<i32: 1>} : vector<8x128xi32>
    %cst_32 = arith.constant 0.000000e+00 : f32
    %47 = vector.broadcast %cst_32 : f32 to vector<8x128xf32>
    %48 = arith.maximumf %45, %47 : vector<8x128xf32>
    %49 = vector.broadcast %cst_32 : f32 to vector<8x128xf32>
    %50 = arith.subf %45, %49 : vector<8x128xf32>
    %51 = arith.cmpf one, %50, %50 : vector<8x128xf32>
    %52 = vector.broadcast %cst_32 : f32 to vector<8x128xf32>
    %53 = arith.addf %45, %52 : vector<8x128xf32>
    %54 = math.absf %50 : vector<8x128xf32>
    %cst_33 = arith.constant 0.000000e+00 : f32
    %55 = vector.broadcast %cst_33 : f32 to vector<8x128xf32>
    %56 = arith.subf %55, %54 : vector<8x128xf32>
    %57 = math.exp %56 : vector<8x128xf32>
    %58 = math.log1p %57 : vector<8x128xf32>
    %59 = arith.addf %48, %58 : vector<8x128xf32>
    %60 = arith.select %51, %53, %59 : vector<8x128xi1>, vector<8x128xf32>
    %c64_i32 = arith.constant 64 : i32
    %61 = vector.broadcast %c64_i32 : i32 to vector<8x128xi32>
    %62 = arith.cmpi sge, %46, %61 : vector<8x128xi32>
    %cst_34 = arith.constant 1.000000e-01 : f32
    %63 = vector.broadcast %cst_34 : f32 to vector<8x128xf32>
    %64 = arith.addf %60, %63 : vector<8x128xf32>
    %65 = arith.select %62, %64, %45 : vector<8x128xi1>, vector<8x128xf32>
    %c0_35 = arith.constant 0 : index
    %c0_36 = arith.constant 0 : index
    %66 = vector.load %arg12[%c0_35, %c0_36] : memref<8x128xf32, #tpu.memory_space<vmem>>, vector<8x128xf32>
    tpu.vector_store %arg12[%c0_35, %c0_36], %65 {strides = array<i32>} : memref<8x128xf32, #tpu.memory_space<vmem>>, vector<8x128xf32>,
    return
  }
}

</mosaic_0001>

<llo_original>
// kernel: tpu_custom_call.1
$region0: #{tpu_custom_call.1}
  #allocation0 [shape = 'u32[]', space=smem, size = 0x4, offset = 0x4, fixed_abs, tag = 'smem constant byte address 0x4 - core index']
  #allocation1 [shape = 'u32[144,128]{1,0:T(1,128)}', space=vmem, size = 0x12000, scoped, tag = 'internal scratch']
  %s0 = inlined_call_operand.hbm [shape: f32[8,32], index: 0, kind: input, shape index: {}]
  %s1 = inlined_call_operand.hbm [shape: f32[8,128], index: 1, kind: input, shape index: {}]
  %s2 = inlined_call_operand.hbm [shape: f32[8,128], index: 2, kind: input, shape index: {}]
  %s3 = inlined_call_operand.hbm [shape: f32[32,512], index: 3, kind: input, shape index: {}]
  %s4 = inlined_call_operand.hbm [shape: f32[128,512], index: 4, kind: input, shape index: {}]
  %s5 = inlined_call_operand.vmem [shape: f32[1,512], index: 5, kind: input, shape index: {}]
  %s6 = inlined_call_operand.hbm [shape: f32[128,128], index: 6, kind: input, shape index: {}]
  %s7 = inlined_call_operand.hbm [shape: f32[128,128], index: 7, kind: input, shape index: {}]
  %s8 = inlined_call_operand.vmem [shape: f32[1,128], index: 8, kind: input, shape index: {}]
  %s9 = inlined_call_operand.hbm [shape: f32[128,128], index: 9, kind: input, shape index: {}]
  %s10 = inlined_call_operand.hbm [shape: f32[128,128], index: 10, kind: input, shape index: {}]
  %s11 = inlined_call_operand.vmem [shape: f32[1,128], index: 11, kind: input, shape index: {}]
  %s12 = inlined_call_operand.hbm [shape: f32[8,128], index: 12, kind: output, shape index: {0}]
  %s13 = inlined_call_operand.hbm [shape: f32[8,128], index: 13, kind: output, shape index: {1}]
  %14 = xla_tuple %s12, %s13
  %s15 = sld [smem:[#allocation0]]
  $region102: #{tpu_custom_call.1} parent=0
    _
  %s17 = ssub.s32 1, %s15
  %s18 = scalar_select 0, %s17, %s15
  $region1: #{tpu_custom_call.1} parent=0
    #allocation2 [shape = 'u8[4096]{0}', space=vmem, size = 0x1000, scoped, tag = 'input window, operand 0, single buffered']
    #allocation3 [shape = 's32[1]{0}', space=sflag, size = 0x4, scoped, tag = 'scoped memory for tpu_custom_call.1']
    #allocation4 [shape = 's32[1]{0}', space=sflag, size = 0x4, scoped, tag = 'scoped memory for tpu_custom_call.1']
    #allocation5 [shape = 'u8[4096]{0}', space=vmem, size = 0x1000, scoped, tag = 'input window, operand 1, single buffered']
    #allocation6 [shape = 's32[1]{0}', space=sflag, size = 0x4, scoped, tag = 'scoped memory for tpu_custom_call.1']
    #allocation7 [shape = 'u8[4096]{0}', space=vmem, size = 0x1000, scoped, tag = 'input window, operand 2, single buffered']
    #allocation8 [shape = 'u8[65536]{0}', space=vmem, size = 0x10000, scoped, tag = 'input window, operand 3, single buffered']
    #allocation9 [shape = 's32[1]{0}', space=sflag, size = 0x4, scoped, tag = 'scoped memory for tpu_custom_call.1']
    #allocation10 [shape = 'u8[262144]{0}', space=vmem, size = 0x40000, scoped, tag = 'input window, operand 4, single buffered']
    #allocation11 [shape = 'u8[65536]{0}', space=vmem, size = 0x10000, scoped, tag = 'input window, operand 6, single buffered']
    #allocation12 [shape = 's32[1]{0}', space=sflag, size = 0x4, scoped, tag = 'scoped memory for tpu_custom_call.1']
    #allocation13 [shape = 'u8[65536]{0}', space=vmem, size = 0x10000, scoped, tag = 'input window, operand 7, single buffered']
    #allocation14 [shape = 'u8[65536]{0}', space=vmem, size = 0x10000, scoped, tag = 'input window, operand 9, single buffered']
    #allocation15 [shape = 's32[1]{0}', space=sflag, size = 0x4, scoped, tag = 'scoped memory for tpu_custom_call.1']
    #allocation16 [shape = 'u8[65536]{0}', space=vmem, size = 0x10000, scoped, tag = 'input window, operand 10, single buffered']
    #allocation17 [shape = 'u8[4096]{0}', space=vmem, size = 0x1000, scoped, tag = 'output window, operand 0, single buffered']
    #allocation18 [shape = 'u8[4096]{0}', space=vmem, size = 0x1000, scoped, tag = 'output window, operand 1, single buffered']
    #allocation19 [shape = 's32[1]{0}', space=sflag, size = 0x4, scoped, tag = 'scoped memory for tpu_custom_call.1']
    %19 = vsyncpa [#allocation3], 0
    %20 = vsyncpa [#allocation6], 0
    %21 = vsyncpa [#allocation9], 0
    %22 = vsyncpa [#allocation12], 0
    %23 = vsyncpa [#allocation15], 0
    %24 = vsyncpa [#allocation4], 0
    %25 = vsyncpa [#allocation19], 0
    // Predicated region
    $region2: #{tpu_custom_call.1} parent=1 // pred_check
      _
    $region3: #{tpu_custom_call.1} parent=1 // pred_check_branch
      %27 = sbr.rel (0) target = $region5
    $region4: #{tpu_custom_call.1} parent=1 // pred_region
      %s29 = ssub.s32 128, 128
      %30 = vsyncadd [#allocation3], %s29
      %s32 = sshll.u32 [#allocation2], 4
      %s33 = int_to_ptr.vmem [resolvable:$true] %s32
      %35 = dma.hbm_to_vmem [thread:$0]  %s0, 128, %s33, [#allocation3]
    $region5: #{tpu_custom_call.1} parent=1 // pred_fallthru
      _
    // Predicated region
    $region6: #{tpu_custom_call.1} parent=1 // pred_check
      _
    $region7: #{tpu_custom_call.1} parent=1 // pred_check_branch
      %37 = sbr.rel (0) target = $region9
    $region8: #{tpu_custom_call.1} parent=1 // pred_region
      %s39 = ssub.s32 128, 128
      %40 = vsyncadd [#allocation6], %s39
      %s42 = sshll.u32 [#allocation5], 4
      %s43 = int_to_ptr.vmem [resolvable:$true] %s42
      %45 = dma.hbm_to_vmem [thread:$0]  %s1, 128, %s43, [#allocation6]
    $region9: #{tpu_custom_call.1} parent=1 // pred_fallthru
      _
    // Predicated region
    $region10: #{tpu_custom_call.1} parent=1 // pred_check
      _
    $region11: #{tpu_custom_call.1} parent=1 // pred_check_branch
      %47 = sbr.rel (0) target = $region13
    $region12: #{tpu_custom_call.1} parent=1 // pred_region
      %s49 = ssub.s32 128, 128
      %50 = vsyncadd [#allocation6], %s49
      %s52 = sshll.u32 [#allocation7], 4
      %s53 = int_to_ptr.vmem [resolvable:$true] %s52
      %55 = dma.hbm_to_vmem [thread:$0]  %s2, 128, %s53, [#allocation6]
    $region13: #{tpu_custom_call.1} parent=1 // pred_fallthru
      _
    // Predicated region
    $region14: #{tpu_custom_call.1} parent=1 // pred_check
      _
    $region15: #{tpu_custom_call.1} parent=1 // pred_check_branch
      %57 = sbr.rel (0) target = $region17
    $region16: #{tpu_custom_call.1} parent=1 // pred_region
      %s59 = ssub.s32 2048, 2048
      %60 = vsyncadd [#allocation9], %s59
      %s61 = sshll.u32 [#allocation8], 4
      %s62 = int_to_ptr.vmem [resolvable:$true] %s61
      %67 = dma.hbm_to_vmem [thread:$0]  %s3, 2048, %s62, [#allocation9], 512, 512, 32
    $region17: #{tpu_custom_call.1} parent=1 // pred_fallthru
      _
    // Predicated region
    $region18: #{tpu_custom_call.1} parent=1 // pred_check
      _
    $region19: #{tpu_custom_call.1} parent=1 // pred_check_branch
      %69 = sbr.rel (0) target = $region21
    $region20: #{tpu_custom_call.1} parent=1 // pred_region
      %s71 = ssub.s32 8192, 8192
      %72 = vsyncadd [#allocation9], %s71
      %s73 = sshll.u32 [#allocation10], 4
      %s74 = int_to_ptr.vmem [resolvable:$true] %s73
      %79 = dma.hbm_to_vmem [thread:$0]  %s4, 8192, %s74, [#allocation9], 512, 512, 32
    $region21: #{tpu_custom_call.1} parent=1 // pred_fallthru
      _
    // Predicated region
    $region22: #{tpu_custom_call.1} parent=1 // pred_check
      _
    $region23: #{tpu_custom_call.1} parent=1 // pred_check_branch
      %81 = sbr.rel (0) target = $region25
    $region24: #{tpu_custom_call.1} parent=1 // pred_region
      _
    $region25: #{tpu_custom_call.1} parent=1 // pred_fallthru
      _
    // Predicated region
    $region26: #{tpu_custom_call.1} parent=1 // pred_check
      _
    $region27: #{tpu_custom_call.1} parent=1 // pred_check_branch
      %83 = sbr.rel (0) target = $region29
    $region28: #{tpu_custom_call.1} parent=1 // pred_region
      %s85 = ssub.s32 2048, 2048
      %86 = vsyncadd [#allocation12], %s85
      %s87 = sshll.u32 [#allocation11], 4
      %s88 = int_to_ptr.vmem [resolvable:$true] %s87
      %93 = dma.hbm_to_vmem [thread:$0]  %s6, 2048, %s88, [#allocation12], 128, 128, 8
    $region29: #{tpu_custom_call.1} parent=1 // pred_fallthru
      _
    // Predicated region
    $region30: #{tpu_custom_call.1} parent=1 // pred_check
      _
    $region31: #{tpu_custom_call.1} parent=1 // pred_check_branch
      %95 = sbr.rel (0) target = $region33
    $region32: #{tpu_custom_call.1} parent=1 // pred_region
      %s97 = ssub.s32 2048, 2048
      %98 = vsyncadd [#allocation12], %s97
      %s99 = sshll.u32 [#allocation13], 4
      %s100 = int_to_ptr.vmem [resolvable:$true] %s99
      %105 = dma.hbm_to_vmem [thread:$0]  %s7, 2048, %s100, [#allocation12], 128, 128, 8
    $region33: #{tpu_custom_call.1} parent=1 // pred_fallthru
      _
    // Predicated region
    $region34: #{tpu_custom_call.1} parent=1 // pred_check
      _
    $region35: #{tpu_custom_call.1} parent=1 // pred_check_branch
      %107 = sbr.rel (0) target = $region37
    $region36: #{tpu_custom_call.1} parent=1 // pred_region
      _
    $region37: #{tpu_custom_call.1} parent=1 // pred_fallthru
      _
    // Predicated region
    $region38: #{tpu_custom_call.1} parent=1 // pred_check
      _
    $region39: #{tpu_custom_call.1} parent=1 // pred_check_branch
      %109 = sbr.rel (0) target = $region41
    $region40: #{tpu_custom_call.1} parent=1 // pred_region
      %s111 = ssub.s32 2048, 2048
      %112 = vsyncadd [#allocation15], %s111
      %s113 = sshll.u32 [#allocation14], 4
      %s114 = int_to_ptr.vmem [resolvable:$true] %s113
      %119 = dma.hbm_to_vmem [thread:$0]  %s9, 2048, %s114, [#allocation15], 128, 128, 8
    $region41: #{tpu_custom_call.1} parent=1 // pred_fallthru
      _
    // Predicated region
    $region42: #{tpu_custom_call.1} parent=1 // pred_check
      _
    $region43: #{tpu_custom_call.1} parent=1 // pred_check_branch
      %121 = sbr.rel (0) target = $region45
    $region44: #{tpu_custom_call.1} parent=1 // pred_region
      %s123 = ssub.s32 2048, 2048
      %124 = vsyncadd [#allocation15], %s123
      %s125 = sshll.u32 [#allocation16], 4
      %s126 = int_to_ptr.vmem [resolvable:$true] %s125
      %131 = dma.hbm_to_vmem [thread:$0]  %s10, 2048, %s126, [#allocation15], 128, 128, 8
    $region45: #{tpu_custom_call.1} parent=1 // pred_fallthru
      _
    // Predicated region
    $region46: #{tpu_custom_call.1} parent=1 // pred_check
      _
    $region47: #{tpu_custom_call.1} parent=1 // pred_check_branch
      %133 = sbr.rel (0) target = $region49
    $region48: #{tpu_custom_call.1} parent=1 // pred_region
      _
    $region49: #{tpu_custom_call.1} parent=1 // pred_fallthru
      _
    // Predicated region
    $region50: #{tpu_custom_call.1} parent=1 // pred_check
      _
    $region51: #{tpu_custom_call.1} parent=1 // pred_check_branch
      %135 = sbr.rel (0) target = $region53
    $region52: #{tpu_custom_call.1} parent=1 // pred_region
      %136 = dma.done [#allocation3], 128
    $region53: #{tpu_custom_call.1} parent=1 // pred_fallthru
      _
    // Predicated region
    $region54: #{tpu_custom_call.1} parent=1 // pred_check
      _
    $region55: #{tpu_custom_call.1} parent=1 // pred_check_branch
      %138 = sbr.rel (0) target = $region57
    $region56: #{tpu_custom_call.1} parent=1 // pred_region
      %139 = dma.done [#allocation6], 128
    $region57: #{tpu_custom_call.1} parent=1 // pred_fallthru
      _
    // Predicated region
    $region58: #{tpu_custom_call.1} parent=1 // pred_check
      _
    $region59: #{tpu_custom_call.1} parent=1 // pred_check_branch
      %141 = sbr.rel (0) target = $region61
    $region60: #{tpu_custom_call.1} parent=1 // pred_region
      %142 = dma.done [#allocation6], 128
    $region61: #{tpu_custom_call.1} parent=1 // pred_fallthru
      _
    // Predicated region
    $region62: #{tpu_custom_call.1} parent=1 // pred_check
      _
    $region63: #{tpu_custom_call.1} parent=1 // pred_check_branch
      %144 = sbr.rel (0) target = $region65
    $region64: #{tpu_custom_call.1} parent=1 // pred_region
      %145 = dma.done [#allocation9], 2048
    $region65: #{tpu_custom_call.1} parent=1 // pred_fallthru
      _
    // Predicated region
    $region66: #{tpu_custom_call.1} parent=1 // pred_check
      _
    $region67: #{tpu_custom_call.1} parent=1 // pred_check_branch
      %147 = sbr.rel (0) target = $region69
    $region68: #{tpu_custom_call.1} parent=1 // pred_region
      %148 = dma.done [#allocation9], 8192
    $region69: #{tpu_custom_call.1} parent=1 // pred_fallthru
      _
    // Predicated region
    $region70: #{tpu_custom_call.1} parent=1 // pred_check
      _
    $region71: #{tpu_custom_call.1} parent=1 // pred_check_branch
      %150 = sbr.rel (0) target = $region73
    $region72: #{tpu_custom_call.1} parent=1 // pred_region
      %151 = dma.done [#allocation12], 2048
    $region73: #{tpu_custom_call.1} parent=1 // pred_fallthru
      _
    // Predicated region
    $region74: #{tpu_custom_call.1} parent=1 // pred_check
      _
    $region75: #{tpu_custom_call.1} parent=1 // pred_check_branch
      %153 = sbr.rel (0) target = $region77
    $region76: #{tpu_custom_call.1} parent=1 // pred_region
      %154 = dma.done [#allocation12], 2048
    $region77: #{tpu_custom_call.1} parent=1 // pred_fallthru
      _
    // Predicated region
    $region78: #{tpu_custom_call.1} parent=1 // pred_check
      _
    $region79: #{tpu_custom_call.1} parent=1 // pred_check_branch
      %156 = sbr.rel (0) target = $region81
    $region80: #{tpu_custom_call.1} parent=1 // pred_region
      %157 = dma.done [#allocation15], 2048
    $region81: #{tpu_custom_call.1} parent=1 // pred_fallthru
      _
    // Predicated region
    $region82: #{tpu_custom_call.1} parent=1 // pred_check
      _
    $region83: #{tpu_custom_call.1} parent=1 // pred_check_branch
      %159 = sbr.rel (0) target = $region85
    $region84: #{tpu_custom_call.1} parent=1 // pred_region
      %160 = dma.done [#allocation15], 2048
    $region85: #{tpu_custom_call.1} parent=1 // pred_fallthru
      _
    %v161 = vld [vmem:[#allocation2] sm:$0xff]
    %v162 = vld [vmem:[#allocation5] sm:$0xff]
    %v163 = vld [vmem:[#allocation7] sm:$0xff]
    %v164 = vld [vmem:[#allocation8] sm:$0xff]
    %v165 = vld [vmem:[#allocation8 + $0x8] sm:$0xff]
    %v166 = vld [vmem:[#allocation8 + $0x10] sm:$0xff]
    %v167 = vld [vmem:[#allocation8 + $0x18] sm:$0xff]
    %v168 = vld [vmem:[#allocation8 + $0x20] sm:$0xff]
    %v169 = vld [vmem:[#allocation8 + $0x28] sm:$0xff]
    %v170 = vld [vmem:[#allocation8 + $0x30] sm:$0xff]
    %v171 = vld [vmem:[#allocation8 + $0x38] sm:$0xff]
    %v172 = vld [vmem:[#allocation8 + $0x40] sm:$0xff]
    %v173 = vld [vmem:[#allocation8 + $0x48] sm:$0xff]
    %v174 = vld [vmem:[#allocation8 + $0x50] sm:$0xff]
    %v175 = vld [vmem:[#allocation8 + $0x58] sm:$0xff]
    %v176 = vld [vmem:[#allocation8 + $0x60] sm:$0xff]
    %v177 = vld [vmem:[#allocation8 + $0x68] sm:$0xff]
    %v178 = vld [vmem:[#allocation8 + $0x70] sm:$0xff]
    %v179 = vld [vmem:[#allocation8 + $0x78] sm:$0xff]
    %v180 = vld [vmem:[#allocation10] sm:$0xff]
    %v181 = vld [vmem:[#allocation10 + $0x8] sm:$0xff]
    %v182 = vld [vmem:[#allocation10 + $0x10] sm:$0xff]
    %v183 = vld [vmem:[#allocation10 + $0x18] sm:$0xff]
    %v184 = vld [vmem:[#allocation10 + $0x20] sm:$0xff]
    %v185 = vld [vmem:[#allocation10 + $0x28] sm:$0xff]
    %v186 = vld [vmem:[#allocation10 + $0x30] sm:$0xff]
    %v187 = vld [vmem:[#allocation10 + $0x38] sm:$0xff]
    %v188 = vld [vmem:[#allocation10 + $0x40] sm:$0xff]
    %v189 = vld [vmem:[#allocation10 + $0x48] sm:$0xff]
    %v190 = vld [vmem:[#allocation10 + $0x50] sm:$0xff]
    %v191 = vld [vmem:[#allocation10 + $0x58] sm:$0xff]
    %v192 = vld [vmem:[#allocation10 + $0x60] sm:$0xff]
    %v193 = vld [vmem:[#allocation10 + $0x68] sm:$0xff]
    %v194 = vld [vmem:[#allocation10 + $0x70] sm:$0xff]
    %v195 = vld [vmem:[#allocation10 + $0x78] sm:$0xff]
    %v196 = vld [vmem:[#allocation10 + $0x80] sm:$0xff]
    %v197 = vld [vmem:[#allocation10 + $0x88] sm:$0xff]
    %v198 = vld [vmem:[#allocation10 + $0x90] sm:$0xff]
    %v199 = vld [vmem:[#allocation10 + $0x98] sm:$0xff]
    %v200 = vld [vmem:[#allocation10 + $0xa0] sm:$0xff]
    %v201 = vld [vmem:[#allocation10 + $0xa8] sm:$0xff]
    %v202 = vld [vmem:[#allocation10 + $0xb0] sm:$0xff]
    %v203 = vld [vmem:[#allocation10 + $0xb8] sm:$0xff]
    %v204 = vld [vmem:[#allocation10 + $0xc0] sm:$0xff]
    %v205 = vld [vmem:[#allocation10 + $0xc8] sm:$0xff]
    %v206 = vld [vmem:[#allocation10 + $0xd0] sm:$0xff]
    %v207 = vld [vmem:[#allocation10 + $0xd8] sm:$0xff]
    %v208 = vld [vmem:[#allocation10 + $0xe0] sm:$0xff]
    %v209 = vld [vmem:[#allocation10 + $0xe8] sm:$0xff]
    %v210 = vld [vmem:[#allocation10 + $0xf0] sm:$0xff]
    %v211 = vld [vmem:[#allocation10 + $0xf8] sm:$0xff]
    %v212 = vld [vmem:[#allocation10 + $0x100] sm:$0xff]
    %v213 = vld [vmem:[#allocation10 + $0x108] sm:$0xff]
    %v214 = vld [vmem:[#allocation10 + $0x110] sm:$0xff]
    %v215 = vld [vmem:[#allocation10 + $0x118] sm:$0xff]
    %v216 = vld [vmem:[#allocation10 + $0x120] sm:$0xff]
    %v217 = vld [vmem:[#allocation10 + $0x128] sm:$0xff]
    %v218 = vld [vmem:[#allocation10 + $0x130] sm:$0xff]
    %v219 = vld [vmem:[#allocation10 + $0x138] sm:$0xff]
    %v220 = vld [vmem:[#allocation10 + $0x140] sm:$0xff]
    %v221 = vld [vmem:[#allocation10 + $0x148] sm:$0xff]
    %v222 = vld [vmem:[#allocation10 + $0x150] sm:$0xff]
    %v223 = vld [vmem:[#allocation10 + $0x158] sm:$0xff]
    %v224 = vld [vmem:[#allocation10 + $0x160] sm:$0xff]
    %v225 = vld [vmem:[#allocation10 + $0x168] sm:$0xff]
    %v226 = vld [vmem:[#allocation10 + $0x170] sm:$0xff]
    %v227 = vld [vmem:[#allocation10 + $0x178] sm:$0xff]
    %v228 = vld [vmem:[#allocation10 + $0x180] sm:$0xff]
    %v229 = vld [vmem:[#allocation10 + $0x188] sm:$0xff]
    %v230 = vld [vmem:[#allocation10 + $0x190] sm:$0xff]
    %v231 = vld [vmem:[#allocation10 + $0x198] sm:$0xff]
    %v232 = vld [vmem:[#allocation10 + $0x1a0] sm:$0xff]
    %v233 = vld [vmem:[#allocation10 + $0x1a8] sm:$0xff]
    %v234 = vld [vmem:[#allocation10 + $0x1b0] sm:$0xff]
    %v235 = vld [vmem:[#allocation10 + $0x1b8] sm:$0xff]
    %v236 = vld [vmem:[#allocation10 + $0x1c0] sm:$0xff]
    %v237 = vld [vmem:[#allocation10 + $0x1c8] sm:$0xff]
    %v238 = vld [vmem:[#allocation10 + $0x1d0] sm:$0xff]
    %v239 = vld [vmem:[#allocation10 + $0x1d8] sm:$0xff]
    %v240 = vld [vmem:[#allocation10 + $0x1e0] sm:$0xff]
    %v241 = vld [vmem:[#allocation10 + $0x1e8] sm:$0xff]
    %v242 = vld [vmem:[#allocation10 + $0x1f0] sm:$0xff]
    %v243 = vld [vmem:[#allocation10 + $0x1f8] sm:$0xff]
    %244 = vmatprep.subr.mxu0 %v181
    %245 = vmatpush1.msra.mxu0 %v180
    %246 = vmatprep.subr.mxu0 %v185
    %247 = vmatpush1.msra.mxu0 %v184
    %248 = vmatprep.subr.mxu0 %v189
    %249 = vmatpush1.msra.mxu0 %v188
    %250 = vmatprep.subr.mxu0 %v193
    %251 = vmatpush1.msra.mxu0 %v192
    %252 = vmatprep.subr.mxu0 %v197
    %253 = vmatpush1.msra.mxu0 %v196
    %254 = vmatprep.subr.mxu0 %v201
    %255 = vmatpush1.msra.mxu0 %v200
    %256 = vmatprep.subr.mxu0 %v205
    %257 = vmatpush1.msra.mxu0 %v204
    %258 = vmatprep.subr.mxu0 %v209
    %259 = vmatpush1.msra.mxu0 %v208
    %260 = vmatprep.subr.mxu0 %v213
    %261 = vmatpush1.msra.mxu0 %v212
    %262 = vmatprep.subr.mxu0 %v217
    %263 = vmatpush1.msra.mxu0 %v216
    %264 = vmatprep.subr.mxu0 %v221
    %265 = vmatpush1.msra.mxu0 %v220
    %266 = vmatprep.subr.mxu0 %v225
    %267 = vmatpush1.msra.mxu0 %v224
    %268 = vmatprep.subr.mxu0 %v229
    %269 = vmatpush1.msra.mxu0 %v228
    %270 = vmatprep.subr.mxu0 %v233
    %271 = vmatpush1.msra.mxu0 %v232
    %272 = vmatprep.subr.mxu0 %v237
    %273 = vmatpush1.msra.mxu0 %v236
    %274 = vmatprep.subr.mxu0 %v241
    %275 = vmatpush1.msra.mxu0 %v240
    %276 = vmatprep.subr.mxu0 0.0
    %277 = vmatpush1.msra.mxu0 0.0
    %278 = vmatprep.subr.mxu0 0.0
    %279 = vmatpush1.msra.mxu0 0.0
    %280 = vmatprep.subr.mxu0 0.0
    %281 = vmatpush1.msra.mxu0 0.0
    %282 = vmatprep.subr.mxu0 0.0
    %283 = vmatpush1.msra.mxu0 0.0
    %284 = vmatprep.subr.mxu0 0.0
    %285 = vmatpush1.msra.mxu0 0.0
    %286 = vmatprep.subr.mxu0 0.0
    %287 = vmatpush1.msra.mxu0 0.0
    %288 = vmatprep.subr.mxu0 0.0
    %289 = vmatpush1.msra.mxu0 0.0
    %290 = vmatprep.subr.mxu0 0.0
    %291 = vmatpush1.msra.mxu0 0.0
    %292 = vmatprep.subr.mxu0 0.0
    %293 = vmatpush1.msra.mxu0 0.0
    %294 = vmatprep.subr.mxu0 0.0
    %295 = vmatpush1.msra.mxu0 0.0
    %296 = vmatprep.subr.mxu0 0.0
    %297 = vmatpush1.msra.mxu0 0.0
    %298 = vmatprep.subr.mxu0 0.0
    %299 = vmatpush1.msra.mxu0 0.0
    %300 = vmatprep.subr.mxu0 0.0
    %301 = vmatpush1.msra.mxu0 0.0
    %302 = vmatprep.subr.mxu0 0.0
    %303 = vmatpush1.msra.mxu0 0.0
    %304 = vmatprep.subr.mxu0 0.0
    %305 = vmatpush1.msra.mxu0 0.0
    %306 = vmatprep.subr.mxu0 0.0
    %307 = vmatpush1.msra.mxu0 0.0
    %308 = vmatprep.mubr.f32.mxu0 0.0
    %309 = vmatmul.mubr.f32.gmra.mrb[0].mxu0 %v162
    %v310 = vpop.f32.mrb[0].mxu0
    %v311 = vadd.f32 0.0, %v310
    %v312 = vpop.f32.mrb[0].mxu0
    %v313 = vadd.f32 0.0, %v312
    %314 = vdwg.mxu0
    %315 = vmatprep.subr.mxu0 %v183
    %316 = vmatpush1.msra.mxu0 %v182
    %317 = vmatprep.subr.mxu0 %v187
    %318 = vmatpush1.msra.mxu0 %v186
    %319 = vmatprep.subr.mxu0 %v191
    %320 = vmatpush1.msra.mxu0 %v190
    %321 = vmatprep.subr.mxu0 %v195
    %322 = vmatpush1.msra.mxu0 %v194
    %323 = vmatprep.subr.mxu0 %v199
    %324 = vmatpush1.msra.mxu0 %v198
    %325 = vmatprep.subr.mxu0 %v203
    %326 = vmatpush1.msra.mxu0 %v202
    %327 = vmatprep.subr.mxu0 %v207
    %328 = vmatpush1.msra.mxu0 %v206
    %329 = vmatprep.subr.mxu0 %v211
    %330 = vmatpush1.msra.mxu0 %v210
    %331 = vmatprep.subr.mxu0 %v215
    %332 = vmatpush1.msra.mxu0 %v214
    %333 = vmatprep.subr.mxu0 %v219
    %334 = vmatpush1.msra.mxu0 %v218
    %335 = vmatprep.subr.mxu0 %v223
    %336 = vmatpush1.msra.mxu0 %v222
    %337 = vmatprep.subr.mxu0 %v227
    %338 = vmatpush1.msra.mxu0 %v226
    %339 = vmatprep.subr.mxu0 %v231
    %340 = vmatpush1.msra.mxu0 %v230
    %341 = vmatprep.subr.mxu0 %v235
    %342 = vmatpush1.msra.mxu0 %v234
    %343 = vmatprep.subr.mxu0 %v239
    %344 = vmatpush1.msra.mxu0 %v238
    %345 = vmatprep.subr.mxu0 %v243
    %346 = vmatpush1.msra.mxu0 %v242
    %347 = vmatprep.subr.mxu0 0.0
    %348 = vmatpush1.msra.mxu0 0.0
    %349 = vmatprep.subr.mxu0 0.0
    %350 = vmatpush1.msra.mxu0 0.0
    %351 = vmatprep.subr.mxu0 0.0
    %352 = vmatpush1.msra.mxu0 0.0
    %353 = vmatprep.subr.mxu0 0.0
    %354 = vmatpush1.msra.mxu0 0.0
    %355 = vmatprep.subr.mxu0 0.0
    %356 = vmatpush1.msra.mxu0 0.0
    %357 = vmatprep.subr.mxu0 0.0
    %358 = vmatpush1.msra.mxu0 0.0
    %359 = vmatprep.subr.mxu0 0.0
    %360 = vmatpush1.msra.mxu0 0.0
    %361 = vmatprep.subr.mxu0 0.0
    %362 = vmatpush1.msra.mxu0 0.0
    %363 = vmatprep.subr.mxu0 0.0
    %364 = vmatpush1.msra.mxu0 0.0
    %365 = vmatprep.subr.mxu0 0.0
    %366 = vmatpush1.msra.mxu0 0.0
    %367 = vmatprep.subr.mxu0 0.0
    %368 = vmatpush1.msra.mxu0 0.0
    %369 = vmatprep.subr.mxu0 0.0
    %370 = vmatpush1.msra.mxu0 0.0
    %371 = vmatprep.subr.mxu0 0.0
    %372 = vmatpush1.msra.mxu0 0.0
    %373 = vmatprep.subr.mxu0 0.0
    %374 = vmatpush1.msra.mxu0 0.0
    %375 = vmatprep.subr.mxu0 0.0
    %376 = vmatpush1.msra.mxu0 0.0
    %377 = vmatprep.subr.mxu0 0.0
    %378 = vmatpush1.msra.mxu0 0.0
    %379 = vmatprep.mubr.f32.mxu0 0.0
    %380 = vmatmul.mubr.f32.gmra.mrb[0].mxu0 %v162
    %v381 = vpop.f32.mrb[0].mxu0
    %v382 = vadd.f32 0.0, %v381
    %v383 = vpop.f32.mrb[0].mxu0
    %v384 = vadd.f32 0.0, %v383
    %385 = vdwg.mxu0
    %vm386 = vcmask 261120
    %v388 = vsel %vm386, %v161, 0
    %390 = vmatprep.subr.mxu0 %v165
    %391 = vmatpush1.msra.mxu0 %v164
    %392 = vmatprep.subr.mxu0 %v169
    %393 = vmatpush1.msra.mxu0 %v168
    %394 = vmatprep.subr.mxu0 %v173
    %395 = vmatpush1.msra.mxu0 %v172
    %396 = vmatprep.subr.mxu0 %v177
    %397 = vmatpush1.msra.mxu0 %v176
    %398 = vmatprep.subr.mxu0 0.0
    %399 = vmatpush1.msra.mxu0 0.0
    %400 = vmatprep.subr.mxu0 0.0
    %401 = vmatpush1.msra.mxu0 0.0
    %402 = vmatprep.subr.mxu0 0.0
    %403 = vmatpush1.msra.mxu0 0.0
    %404 = vmatprep.subr.mxu0 0.0
    %405 = vmatpush1.msra.mxu0 0.0
    %406 = vmatprep.subr.mxu0 0.0
    %407 = vmatpush1.msra.mxu0 0.0
    %408 = vmatprep.subr.mxu0 0.0
    %409 = vmatpush1.msra.mxu0 0.0
    %410 = vmatprep.subr.mxu0 0.0
    %411 = vmatpush1.msra.mxu0 0.0
    %412 = vmatprep.subr.mxu0 0.0
    %413 = vmatpush1.msra.mxu0 0.0
    %414 = vmatprep.subr.mxu0 0.0
    %415 = vmatpush1.msra.mxu0 0.0
    %416 = vmatprep.subr.mxu0 0.0
    %417 = vmatpush1.msra.mxu0 0.0
    %418 = vmatprep.subr.mxu0 0.0
    %419 = vmatpush1.msra.mxu0 0.0
    %420 = vmatprep.subr.mxu0 0.0
    %421 = vmatpush1.msra.mxu0 0.0
    %422 = vmatprep.subr.mxu0 0.0
    %423 = vmatpush1.msra.mxu0 0.0
    %424 = vmatprep.subr.mxu0 0.0
    %425 = vmatpush1.msra.mxu0 0.0
    %426 = vmatprep.subr.mxu0 0.0
    %427 = vmatpush1.msra.mxu0 0.0
    %428 = vmatprep.subr.mxu0 0.0
    %429 = vmatpush1.msra.mxu0 0.0
    %430 = vmatprep.subr.mxu0 0.0
    %431 = vmatpush1.msra.mxu0 0.0
    %432 = vmatprep.subr.mxu0 0.0
    %433 = vmatpush1.msra.mxu0 0.0
    %434 = vmatprep.subr.mxu0 0.0
    %435 = vmatpush1.msra.mxu0 0.0
    %436 = vmatprep.subr.mxu0 0.0
    %437 = vmatpush1.msra.mxu0 0.0
    %438 = vmatprep.subr.mxu0 0.0
    %439 = vmatpush1.msra.mxu0 0.0
    %440 = vmatprep.subr.mxu0 0.0
    %441 = vmatpush1.msra.mxu0 0.0
    %442 = vmatprep.subr.mxu0 0.0
    %443 = vmatpush1.msra.mxu0 0.0
    %444 = vmatprep.subr.mxu0 0.0
    %445 = vmatpush1.msra.mxu0 0.0
    %446 = vmatprep.subr.mxu0 0.0
    %447 = vmatpush1.msra.mxu0 0.0
    %448 = vmatprep.subr.mxu0 0.0
    %449 = vmatpush1.msra.mxu0 0.0
    %450 = vmatprep.subr.mxu0 0.0
    %451 = vmatpush1.msra.mxu0 0.0
    %452 = vmatprep.subr.mxu0 0.0
    %453 = vmatpush1.msra.mxu0 0.0
    %454 = vmatprep.mubr.f32.mxu0 0.0
    %455 = vmatmul.mubr.f32.gmra.mrb[0].mxu0 %v388
    %v456 = vpop.f32.mrb[0].mxu0
    %v457 = vadd.f32 %v311, %v456
    %v458 = vpop.f32.mrb[0].mxu0
    %v459 = vadd.f32 %v313, %v458
    %460 = vdwg.mxu0
    %461 = vmatprep.subr.mxu0 %v167
    %462 = vmatpush1.msra.mxu0 %v166
    %463 = vmatprep.subr.mxu0 %v171
    %464 = vmatpush1.msra.mxu0 %v170
    %465 = vmatprep.subr.mxu0 %v175
    %466 = vmatpush1.msra.mxu0 %v174
    %467 = vmatprep.subr.mxu0 %v179
    %468 = vmatpush1.msra.mxu0 %v178
    %469 = vmatprep.subr.mxu0 0.0
    %470 = vmatpush1.msra.mxu0 0.0
    %471 = vmatprep.subr.mxu0 0.0
    %472 = vmatpush1.msra.mxu0 0.0
    %473 = vmatprep.subr.mxu0 0.0
    %474 = vmatpush1.msra.mxu0 0.0
    %475 = vmatprep.subr.mxu0 0.0
    %476 = vmatpush1.msra.mxu0 0.0
    %477 = vmatprep.subr.mxu0 0.0
    %478 = vmatpush1.msra.mxu0 0.0
    %479 = vmatprep.subr.mxu0 0.0
    %480 = vmatpush1.msra.mxu0 0.0
    %481 = vmatprep.subr.mxu0 0.0
    %482 = vmatpush1.msra.mxu0 0.0
    %483 = vmatprep.subr.mxu0 0.0
    %484 = vmatpush1.msra.mxu0 0.0
    %485 = vmatprep.subr.mxu0 0.0
    %486 = vmatpush1.msra.mxu0 0.0
    %487 = vmatprep.subr.mxu0 0.0
    %488 = vmatpush1.msra.mxu0 0.0
    %489 = vmatprep.subr.mxu0 0.0
    %490 = vmatpush1.msra.mxu0 0.0
    %491 = vmatprep.subr.mxu0 0.0
    %492 = vmatpush1.msra.mxu0 0.0
    %493 = vmatprep.subr.mxu0 0.0
    %494 = vmatpush1.msra.mxu0 0.0
    %495 = vmatprep.subr.mxu0 0.0
    %496 = vmatpush1.msra.mxu0 0.0
    %497 = vmatprep.subr.mxu0 0.0
    %498 = vmatpush1.msra.mxu0 0.0
    %499 = vmatprep.subr.mxu0 0.0
    %500 = vmatpush1.msra.mxu0 0.0
    %501 = vmatprep.subr.mxu0 0.0
    %502 = vmatpush1.msra.mxu0 0.0
    %503 = vmatprep.subr.mxu0 0.0
    %504 = vmatpush1.msra.mxu0 0.0
    %505 = vmatprep.subr.mxu0 0.0
    %506 = vmatpush1.msra.mxu0 0.0
    %507 = vmatprep.subr.mxu0 0.0
    %508 = vmatpush1.msra.mxu0 0.0
    %509 = vmatprep.subr.mxu0 0.0
    %510 = vmatpush1.msra.mxu0 0.0
    %511 = vmatprep.subr.mxu0 0.0
    %512 = vmatpush1.msra.mxu0 0.0
    %513 = vmatprep.subr.mxu0 0.0
    %514 = vmatpush1.msra.mxu0 0.0
    %515 = vmatprep.subr.mxu0 0.0
    %516 = vmatpush1.msra.mxu0 0.0
    %517 = vmatprep.subr.mxu0 0.0
    %518 = vmatpush1.msra.mxu0 0.0
    %519 = vmatprep.subr.mxu0 0.0
    %520 = vmatpush1.msra.mxu0 0.0
    %521 = vmatprep.subr.mxu0 0.0
    %522 = vmatpush1.msra.mxu0 0.0
    %523 = vmatprep.subr.mxu0 0.0
    %524 = vmatpush1.msra.mxu0 0.0
    %525 = vmatprep.mubr.f32.mxu0 0.0
    %526 = vmatmul.mubr.f32.gmra.mrb[0].mxu0 %v388
    %v527 = vpop.f32.mrb[0].mxu0
    %v528 = vadd.f32 %v382, %v527
    %v529 = vpop.f32.mrb[0].mxu0
    %v530 = vadd.f32 %v384, %v529
    %531 = vdwg.mxu0
    %v532 = vld [vmem:[%s5] sm:$0xf]
    %v534 = vlaneseq
    %v535 = vshrl.u32 %v534, 7
    %v536 = vsub.s32 0, %v535
    %v537 = vrot.slane %v532, %v536
    %v538 = vlaneseq
    %v539 = vshrl.u32 %v538, 7
    %v540 = vsub.s32 1, %v539
    %v541 = vrot.slane %v532, %v540
    %v542 = vlaneseq
    %v543 = vshrl.u32 %v542, 7
    %v544 = vsub.s32 2, %v543
    %v545 = vrot.slane %v532, %v544
    %v546 = vlaneseq
    %v547 = vshrl.u32 %v546, 7
    %v548 = vsub.s32 3, %v547
    %v549 = vrot.slane %v532, %v548
    %v554 = vadd.f32 %v457, %v537
    %v555 = vadd.f32 %v459, %v541
    %v556 = vadd.f32 %v528, %v545
    %v557 = vadd.f32 %v530, %v549
    %v558 = vxor.u32 %v554, 2147483648
    %v559 = vxor.u32 %v555, 2147483648
    %v560 = vmul.f32 %v558, 1.442695
    %v561 = vpow.pop %v560
    %v562 = vmul.f32 %v559, 1.442695
    %v563 = vpow.pop %v562
    %v564 = vadd.f32 %v561, 1.0
    %v565 = vadd.f32 %v563, 1.0
    %v566 = vrcp.pop %v564
    %v567 = vmul.f32 1.0, %v566
    %v568 = vrcp.pop %v565
    %v569 = vmul.f32 1.0, %v568
    %v570 = vmul.f32 %v567, %v557
    %v571 = vadd.f32 %v556, %v570
    %v572 = vtanh.pop %v571
    %v573 = vsub.f32 1.0, %v569
    %v574 = vmul.f32 %v573, %v572
    %v575 = vmul.f32 %v569, %v162
    %v576 = vadd.f32 %v574, %v575
    %577 = vst [vmem:[#allocation18] sm:$0xff] %v576
    %v578 = vld [vmem:[#allocation11] sm:$0xff]
    %v579 = vld [vmem:[#allocation11 + $0x8] sm:$0xff]
    %v580 = vld [vmem:[#allocation11 + $0x10] sm:$0xff]
    %v581 = vld [vmem:[#allocation11 + $0x18] sm:$0xff]
    %v582 = vld [vmem:[#allocation11 + $0x20] sm:$0xff]
    %v583 = vld [vmem:[#allocation11 + $0x28] sm:$0xff]
    %v584 = vld [vmem:[#allocation11 + $0x30] sm:$0xff]
    %v585 = vld [vmem:[#allocation11 + $0x38] sm:$0xff]
    %v586 = vld [vmem:[#allocation11 + $0x40] sm:$0xff]
    %v587 = vld [vmem:[#allocation11 + $0x48] sm:$0xff]
    %v588 = vld [vmem:[#allocation11 + $0x50] sm:$0xff]
    %v589 = vld [vmem:[#allocation11 + $0x58] sm:$0xff]
    %v590 = vld [vmem:[#allocation11 + $0x60] sm:$0xff]
    %v591 = vld [vmem:[#allocation11 + $0x68] sm:$0xff]
    %v592 = vld [vmem:[#allocation11 + $0x70] sm:$0xff]
    %v593 = vld [vmem:[#allocation11 + $0x78] sm:$0xff]
    %v594 = vld [vmem:[#allocation13] sm:$0xff]
    %v595 = vld [vmem:[#allocation13 + $0x8] sm:$0xff]
    %v596 = vld [vmem:[#allocation13 + $0x10] sm:$0xff]
    %v597 = vld [vmem:[#allocation13 + $0x18] sm:$0xff]
    %v598 = vld [vmem:[#allocation13 + $0x20] sm:$0xff]
    %v599 = vld [vmem:[#allocation13 + $0x28] sm:$0xff]
    %v600 = vld [vmem:[#allocation13 + $0x30] sm:$0xff]
    %v601 = vld [vmem:[#allocation13 + $0x38] sm:$0xff]
    %v602 = vld [vmem:[#allocation13 + $0x40] sm:$0xff]
    %v603 = vld [vmem:[#allocation13 + $0x48] sm:$0xff]
    %v604 = vld [vmem:[#allocation13 + $0x50] sm:$0xff]
    %v605 = vld [vmem:[#allocation13 + $0x58] sm:$0xff]
    %v606 = vld [vmem:[#allocation13 + $0x60] sm:$0xff]
    %v607 = vld [vmem:[#allocation13 + $0x68] sm:$0xff]
    %v608 = vld [vmem:[#allocation13 + $0x70] sm:$0xff]
    %v609 = vld [vmem:[#allocation13 + $0x78] sm:$0xff]
    %610 = vmatprep.subr.mxu0 0.0
    %611 = vmatpush1.msra.mxu0 %v594
    %612 = vmatprep.subr.mxu0 0.0
    %613 = vmatpush1.msra.mxu0 %v595
    %614 = vmatprep.subr.mxu0 0.0
    %615 = vmatpush1.msra.mxu0 %v596
    %616 = vmatprep.subr.mxu0 0.0
    %617 = vmatpush1.msra.mxu0 %v597
    %618 = vmatprep.subr.mxu0 0.0
    %619 = vmatpush1.msra.mxu0 %v598
    %620 = vmatprep.subr.mxu0 0.0
    %621 = vmatpush1.msra.mxu0 %v599
    %622 = vmatprep.subr.mxu0 0.0
    %623 = vmatpush1.msra.mxu0 %v600
    %624 = vmatprep.subr.mxu0 0.0
    %625 = vmatpush1.msra.mxu0 %v601
    %626 = vmatprep.subr.mxu0 0.0
    %627 = vmatpush1.msra.mxu0 %v602
    %628 = vmatprep.subr.mxu0 0.0
    %629 = vmatpush1.msra.mxu0 %v603
    %630 = vmatprep.subr.mxu0 0.0
    %631 = vmatpush1.msra.mxu0 %v604
    %632 = vmatprep.subr.mxu0 0.0
    %633 = vmatpush1.msra.mxu0 %v605
    %634 = vmatprep.subr.mxu0 0.0
    %635 = vmatpush1.msra.mxu0 %v606
    %636 = vmatprep.subr.mxu0 0.0
    %637 = vmatpush1.msra.mxu0 %v607
    %638 = vmatprep.subr.mxu0 0.0
    %639 = vmatpush1.msra.mxu0 %v608
    %640 = vmatprep.subr.mxu0 0.0
    %641 = vmatpush1.msra.mxu0 %v609
    %642 = vmatprep.subr.mxu0 0.0
    %643 = vmatpush1.msra.mxu0 0.0
    %644 = vmatprep.subr.mxu0 0.0
    %645 = vmatpush1.msra.mxu0 0.0
    %646 = vmatprep.subr.mxu0 0.0
    %647 = vmatpush1.msra.mxu0 0.0
    %648 = vmatprep.subr.mxu0 0.0
    %649 = vmatpush1.msra.mxu0 0.0
    %650 = vmatprep.subr.mxu0 0.0
    %651 = vmatpush1.msra.mxu0 0.0
    %652 = vmatprep.subr.mxu0 0.0
    %653 = vmatpush1.msra.mxu0 0.0
    %654 = vmatprep.subr.mxu0 0.0
    %655 = vmatpush1.msra.mxu0 0.0
    %656 = vmatprep.subr.mxu0 0.0
    %657 = vmatpush1.msra.mxu0 0.0
    %658 = vmatprep.subr.mxu0 0.0
    %659 = vmatpush1.msra.mxu0 0.0
    %660 = vmatprep.subr.mxu0 0.0
    %661 = vmatpush1.msra.mxu0 0.0
    %662 = vmatprep.subr.mxu0 0.0
    %663 = vmatpush1.msra.mxu0 0.0
    %664 = vmatprep.subr.mxu0 0.0
    %665 = vmatpush1.msra.mxu0 0.0
    %666 = vmatprep.subr.mxu0 0.0
    %667 = vmatpush1.msra.mxu0 0.0
    %668 = vmatprep.subr.mxu0 0.0
    %669 = vmatpush1.msra.mxu0 0.0
    %670 = vmatprep.subr.mxu0 0.0
    %671 = vmatpush1.msra.mxu0 0.0
    %672 = vmatprep.subr.mxu0 0.0
    %673 = vmatpush1.msra.mxu0 0.0
    %674 = vmatprep.mubr.f32.mxu0 0.0
    %675 = vmatmul.mubr.f32.gmra.mrb[0].mxu0 %v163
    %v676 = vpop.f32.mrb[0].mxu0
    %v677 = vadd.f32 0.0, %v676
    %v678 = vpop.f32.mrb[0].mxu0
    %679 = vdwg.mxu0
    %680 = vmatprep.subr.mxu0 0.0
    %681 = vmatpush1.msra.mxu0 %v578
    %682 = vmatprep.subr.mxu0 0.0
    %683 = vmatpush1.msra.mxu0 %v579
    %684 = vmatprep.subr.mxu0 0.0
    %685 = vmatpush1.msra.mxu0 %v580
    %686 = vmatprep.subr.mxu0 0.0
    %687 = vmatpush1.msra.mxu0 %v581
    %688 = vmatprep.subr.mxu0 0.0
    %689 = vmatpush1.msra.mxu0 %v582
    %690 = vmatprep.subr.mxu0 0.0
    %691 = vmatpush1.msra.mxu0 %v583
    %692 = vmatprep.subr.mxu0 0.0
    %693 = vmatpush1.msra.mxu0 %v584
    %694 = vmatprep.subr.mxu0 0.0
    %695 = vmatpush1.msra.mxu0 %v585
    %696 = vmatprep.subr.mxu0 0.0
    %697 = vmatpush1.msra.mxu0 %v586
    %698 = vmatprep.subr.mxu0 0.0
    %699 = vmatpush1.msra.mxu0 %v587
    %700 = vmatprep.subr.mxu0 0.0
    %701 = vmatpush1.msra.mxu0 %v588
    %702 = vmatprep.subr.mxu0 0.0
    %703 = vmatpush1.msra.mxu0 %v589
    %704 = vmatprep.subr.mxu0 0.0
    %705 = vmatpush1.msra.mxu0 %v590
    %706 = vmatprep.subr.mxu0 0.0
    %707 = vmatpush1.msra.mxu0 %v591
    %708 = vmatprep.subr.mxu0 0.0
    %709 = vmatpush1.msra.mxu0 %v592
    %710 = vmatprep.subr.mxu0 0.0
    %711 = vmatpush1.msra.mxu0 %v593
    %712 = vmatprep.subr.mxu0 0.0
    %713 = vmatpush1.msra.mxu0 0.0
    %714 = vmatprep.subr.mxu0 0.0
    %715 = vmatpush1.msra.mxu0 0.0
    %716 = vmatprep.subr.mxu0 0.0
    %717 = vmatpush1.msra.mxu0 0.0
    %718 = vmatprep.subr.mxu0 0.0
    %719 = vmatpush1.msra.mxu0 0.0
    %720 = vmatprep.subr.mxu0 0.0
    %721 = vmatpush1.msra.mxu0 0.0
    %722 = vmatprep.subr.mxu0 0.0
    %723 = vmatpush1.msra.mxu0 0.0
    %724 = vmatprep.subr.mxu0 0.0
    %725 = vmatpush1.msra.mxu0 0.0
    %726 = vmatprep.subr.mxu0 0.0
    %727 = vmatpush1.msra.mxu0 0.0
    %728 = vmatprep.subr.mxu0 0.0
    %729 = vmatpush1.msra.mxu0 0.0
    %730 = vmatprep.subr.mxu0 0.0
    %731 = vmatpush1.msra.mxu0 0.0
    %732 = vmatprep.subr.mxu0 0.0
    %733 = vmatpush1.msra.mxu0 0.0
    %734 = vmatprep.subr.mxu0 0.0
    %735 = vmatpush1.msra.mxu0 0.0
    %736 = vmatprep.subr.mxu0 0.0
    %737 = vmatpush1.msra.mxu0 0.0
    %738 = vmatprep.subr.mxu0 0.0
    %739 = vmatpush1.msra.mxu0 0.0
    %740 = vmatprep.subr.mxu0 0.0
    %741 = vmatpush1.msra.mxu0 0.0
    %742 = vmatprep.subr.mxu0 0.0
    %743 = vmatpush1.msra.mxu0 0.0
    %744 = vmatprep.mubr.f32.mxu0 0.0
    %745 = vmatmul.mubr.f32.gmra.mrb[0].mxu0 %v576
    %v746 = vpop.f32.mrb[0].mxu0
    %v747 = vadd.f32 %v677, %v746
    %v748 = vpop.f32.mrb[0].mxu0
    %749 = vdwg.mxu0
    %v750 = vld [vmem:[%s8] sm:$0x1]
    %v752 = vlaneseq
    %v753 = vshrl.u32 %v752, 7
    %v754 = vsub.s32 0, %v753
    %v755 = vrot.slane %v750, %v754
    %v757 = vadd.f32 %v747, %v755
    %v758 = vld [vmem:[#allocation14] sm:$0xff]
    %v759 = vld [vmem:[#allocation14 + $0x8] sm:$0xff]
    %v760 = vld [vmem:[#allocation14 + $0x10] sm:$0xff]
    %v761 = vld [vmem:[#allocation14 + $0x18] sm:$0xff]
    %v762 = vld [vmem:[#allocation14 + $0x20] sm:$0xff]
    %v763 = vld [vmem:[#allocation14 + $0x28] sm:$0xff]
    %v764 = vld [vmem:[#allocation14 + $0x30] sm:$0xff]
    %v765 = vld [vmem:[#allocation14 + $0x38] sm:$0xff]
    %v766 = vld [vmem:[#allocation14 + $0x40] sm:$0xff]
    %v767 = vld [vmem:[#allocation14 + $0x48] sm:$0xff]
    %v768 = vld [vmem:[#allocation14 + $0x50] sm:$0xff]
    %v769 = vld [vmem:[#allocation14 + $0x58] sm:$0xff]
    %v770 = vld [vmem:[#allocation14 + $0x60] sm:$0xff]
    %v771 = vld [vmem:[#allocation14 + $0x68] sm:$0xff]
    %v772 = vld [vmem:[#allocation14 + $0x70] sm:$0xff]
    %v773 = vld [vmem:[#allocation14 + $0x78] sm:$0xff]
    %v774 = vld [vmem:[#allocation16] sm:$0xff]
    %v775 = vld [vmem:[#allocation16 + $0x8] sm:$0xff]
    %v776 = vld [vmem:[#allocation16 + $0x10] sm:$0xff]
    %v777 = vld [vmem:[#allocation16 + $0x18] sm:$0xff]
    %v778 = vld [vmem:[#allocation16 + $0x20] sm:$0xff]
    %v779 = vld [vmem:[#allocation16 + $0x28] sm:$0xff]
    %v780 = vld [vmem:[#allocation16 + $0x30] sm:$0xff]
    %v781 = vld [vmem:[#allocation16 + $0x38] sm:$0xff]
    %v782 = vld [vmem:[#allocation16 + $0x40] sm:$0xff]
    %v783 = vld [vmem:[#allocation16 + $0x48] sm:$0xff]
    %v784 = vld [vmem:[#allocation16 + $0x50] sm:$0xff]
    %v785 = vld [vmem:[#allocation16 + $0x58] sm:$0xff]
    %v786 = vld [vmem:[#allocation16 + $0x60] sm:$0xff]
    %v787 = vld [vmem:[#allocation16 + $0x68] sm:$0xff]
    %v788 = vld [vmem:[#allocation16 + $0x70] sm:$0xff]
    %v789 = vld [vmem:[#allocation16 + $0x78] sm:$0xff]
    %790 = vmatprep.subr.mxu0 0.0
    %791 = vmatpush1.msra.mxu0 %v774
    %792 = vmatprep.subr.mxu0 0.0
    %793 = vmatpush1.msra.mxu0 %v775
    %794 = vmatprep.subr.mxu0 0.0
    %795 = vmatpush1.msra.mxu0 %v776
    %796 = vmatprep.subr.mxu0 0.0
    %797 = vmatpush1.msra.mxu0 %v777
    %798 = vmatprep.subr.mxu0 0.0
    %799 = vmatpush1.msra.mxu0 %v778
    %800 = vmatprep.subr.mxu0 0.0
    %801 = vmatpush1.msra.mxu0 %v779
    %802 = vmatprep.subr.mxu0 0.0
    %803 = vmatpush1.msra.mxu0 %v780
    %804 = vmatprep.subr.mxu0 0.0
    %805 = vmatpush1.msra.mxu0 %v781
    %806 = vmatprep.subr.mxu0 0.0
    %807 = vmatpush1.msra.mxu0 %v782
    %808 = vmatprep.subr.mxu0 0.0
    %809 = vmatpush1.msra.mxu0 %v783
    %810 = vmatprep.subr.mxu0 0.0
    %811 = vmatpush1.msra.mxu0 %v784
    %812 = vmatprep.subr.mxu0 0.0
    %813 = vmatpush1.msra.mxu0 %v785
    %814 = vmatprep.subr.mxu0 0.0
    %815 = vmatpush1.msra.mxu0 %v786
    %816 = vmatprep.subr.mxu0 0.0
    %817 = vmatpush1.msra.mxu0 %v787
    %818 = vmatprep.subr.mxu0 0.0
    %819 = vmatpush1.msra.mxu0 %v788
    %820 = vmatprep.subr.mxu0 0.0
    %821 = vmatpush1.msra.mxu0 %v789
    %822 = vmatprep.subr.mxu0 0.0
    %823 = vmatpush1.msra.mxu0 0.0
    %824 = vmatprep.subr.mxu0 0.0
    %825 = vmatpush1.msra.mxu0 0.0
    %826 = vmatprep.subr.mxu0 0.0
    %827 = vmatpush1.msra.mxu0 0.0
    %828 = vmatprep.subr.mxu0 0.0
    %829 = vmatpush1.msra.mxu0 0.0
    %830 = vmatprep.subr.mxu0 0.0
    %831 = vmatpush1.msra.mxu0 0.0
    %832 = vmatprep.subr.mxu0 0.0
    %833 = vmatpush1.msra.mxu0 0.0
    %834 = vmatprep.subr.mxu0 0.0
    %835 = vmatpush1.msra.mxu0 0.0
    %836 = vmatprep.subr.mxu0 0.0
    %837 = vmatpush1.msra.mxu0 0.0
    %838 = vmatprep.subr.mxu0 0.0
    %839 = vmatpush1.msra.mxu0 0.0
    %840 = vmatprep.subr.mxu0 0.0
    %841 = vmatpush1.msra.mxu0 0.0
    %842 = vmatprep.subr.mxu0 0.0
    %843 = vmatpush1.msra.mxu0 0.0
    %844 = vmatprep.subr.mxu0 0.0
    %845 = vmatpush1.msra.mxu0 0.0
    %846 = vmatprep.subr.mxu0 0.0
    %847 = vmatpush1.msra.mxu0 0.0
    %848 = vmatprep.subr.mxu0 0.0
    %849 = vmatpush1.msra.mxu0 0.0
    %850 = vmatprep.subr.mxu0 0.0
    %851 = vmatpush1.msra.mxu0 0.0
    %852 = vmatprep.subr.mxu0 0.0
    %853 = vmatpush1.msra.mxu0 0.0
    %854 = vmatprep.mubr.f32.mxu0 0.0
    %855 = vmatmul.mubr.f32.gmra.mrb[0].mxu0 %v757
    %v856 = vpop.f32.mrb[0].mxu0
    %v857 = vadd.f32 0.0, %v856
    %v858 = vpop.f32.mrb[0].mxu0
    %859 = vdwg.mxu0
    %860 = vmatprep.subr.mxu0 0.0
    %861 = vmatpush1.msra.mxu0 %v758
    %862 = vmatprep.subr.mxu0 0.0
    %863 = vmatpush1.msra.mxu0 %v759
    %864 = vmatprep.subr.mxu0 0.0
    %865 = vmatpush1.msra.mxu0 %v760
    %866 = vmatprep.subr.mxu0 0.0
    %867 = vmatpush1.msra.mxu0 %v761
    %868 = vmatprep.subr.mxu0 0.0
    %869 = vmatpush1.msra.mxu0 %v762
    %870 = vmatprep.subr.mxu0 0.0
    %871 = vmatpush1.msra.mxu0 %v763
    %872 = vmatprep.subr.mxu0 0.0
    %873 = vmatpush1.msra.mxu0 %v764
    %874 = vmatprep.subr.mxu0 0.0
    %875 = vmatpush1.msra.mxu0 %v765
    %876 = vmatprep.subr.mxu0 0.0
    %877 = vmatpush1.msra.mxu0 %v766
    %878 = vmatprep.subr.mxu0 0.0
    %879 = vmatpush1.msra.mxu0 %v767
    %880 = vmatprep.subr.mxu0 0.0
    %881 = vmatpush1.msra.mxu0 %v768
    %882 = vmatprep.subr.mxu0 0.0
    %883 = vmatpush1.msra.mxu0 %v769
    %884 = vmatprep.subr.mxu0 0.0
    %885 = vmatpush1.msra.mxu0 %v770
    %886 = vmatprep.subr.mxu0 0.0
    %887 = vmatpush1.msra.mxu0 %v771
    %888 = vmatprep.subr.mxu0 0.0
    %889 = vmatpush1.msra.mxu0 %v772
    %890 = vmatprep.subr.mxu0 0.0
    %891 = vmatpush1.msra.mxu0 %v773
    %892 = vmatprep.subr.mxu0 0.0
    %893 = vmatpush1.msra.mxu0 0.0
    %894 = vmatprep.subr.mxu0 0.0
    %895 = vmatpush1.msra.mxu0 0.0
    %896 = vmatprep.subr.mxu0 0.0
    %897 = vmatpush1.msra.mxu0 0.0
    %898 = vmatprep.subr.mxu0 0.0
    %899 = vmatpush1.msra.mxu0 0.0
    %900 = vmatprep.subr.mxu0 0.0
    %901 = vmatpush1.msra.mxu0 0.0
    %902 = vmatprep.subr.mxu0 0.0
    %903 = vmatpush1.msra.mxu0 0.0
    %904 = vmatprep.subr.mxu0 0.0
    %905 = vmatpush1.msra.mxu0 0.0
    %906 = vmatprep.subr.mxu0 0.0
    %907 = vmatpush1.msra.mxu0 0.0
    %908 = vmatprep.subr.mxu0 0.0
    %909 = vmatpush1.msra.mxu0 0.0
    %910 = vmatprep.subr.mxu0 0.0
    %911 = vmatpush1.msra.mxu0 0.0
    %912 = vmatprep.subr.mxu0 0.0
    %913 = vmatpush1.msra.mxu0 0.0
    %914 = vmatprep.subr.mxu0 0.0
    %915 = vmatpush1.msra.mxu0 0.0
    %916 = vmatprep.subr.mxu0 0.0
    %917 = vmatpush1.msra.mxu0 0.0
    %918 = vmatprep.subr.mxu0 0.0
    %919 = vmatpush1.msra.mxu0 0.0
    %920 = vmatprep.subr.mxu0 0.0
    %921 = vmatpush1.msra.mxu0 0.0
    %922 = vmatprep.subr.mxu0 0.0
    %923 = vmatpush1.msra.mxu0 0.0
    %924 = vmatprep.mubr.f32.mxu0 0.0
    %925 = vmatmul.mubr.f32.gmra.mrb[0].mxu0 %v576
    %v926 = vpop.f32.mrb[0].mxu0
    %v927 = vadd.f32 %v857, %v926
    %v928 = vpop.f32.mrb[0].mxu0
    %929 = vdwg.mxu0
    %v930 = vld [vmem:[%s11] sm:$0x1]
    %v932 = vlaneseq
    %v933 = vshrl.u32 %v932, 7
    %v934 = vsub.s32 0, %v933
    %v935 = vrot.slane %v930, %v934
    %v937 = vadd.f32 %v927, %v935
    %v938 = vlaneseq
    %v939 = vand.u32 %v938, 127
    %v940 = vmax.f32 %v937, 0.0
    %vm941 = vcmp.ne.f32.partialorder %v937, %v937
    %v942 = vadd.f32 %v937, 0.0
    %v943 = vand.u32 2147483647, %v937
    %v944 = vsub.f32 0.0, %v943
    %v945 = vmul.f32 %v944, 1.442695
    %v946 = vpow.pop %v945
    %v947 = vadd.f32 %v946, 1.0
    %v948 = vlog2.pop %v947
    %v949 = vmul.f32 %v948, 0.6931472
    %v950 = vmul.f32 -0.5, %v946
    %v951 = vadd.f32 %v950, 1.0
    %v952 = vmul.f32 %v951, %v946
    %v953 = vand.u32 2147483647, %v946
    %vm954 = vcmp.lt.f32.partialorder %v953, 0.0004427343
    %v955 = vsel %vm954, %v952, %v949
    %v956 = vadd.f32 %v940, %v955
    %v957 = vsel %vm941, %v942, %v956
    %vm958 = vcmp.ge.s32.totalorder %v939, 64
    %v959 = vadd.f32 %v957, 0.1
    %v960 = vsel %vm958, %v959, %v937
    %961 = vst [vmem:[#allocation17] sm:$0xff] %v960
    // Predicated region
    $region86: #{tpu_custom_call.1} parent=1 // pred_check
      _
    $region87: #{tpu_custom_call.1} parent=1 // pred_check_branch
      %963 = sbr.rel (0) target = $region89
    $region88: #{tpu_custom_call.1} parent=1 // pred_region
      %s965 = ssub.s32 128, 128
      %966 = vsyncadd [#allocation4], %s965
      %s968 = sshll.u32 [#allocation17], 4
      %s969 = int_to_ptr.vmem [resolvable:$true] %s968
      %971 = dma.vmem_to_hbm [thread:$0]  %s969, 128, %s12, [#allocation4]
    $region89: #{tpu_custom_call.1} parent=1 // pred_fallthru
      _
    // Predicated region
    $region90: #{tpu_custom_call.1} parent=1 // pred_check
      _
    $region91: #{tpu_custom_call.1} parent=1 // pred_check_branch
      %973 = sbr.rel (0) target = $region93
    $region92: #{tpu_custom_call.1} parent=1 // pred_region
      %s975 = ssub.s32 128, 128
      %976 = vsyncadd [#allocation19], %s975
      %s978 = sshll.u32 [#allocation18], 4
      %s979 = int_to_ptr.vmem [resolvable:$true] %s978
      %981 = dma.vmem_to_hbm [thread:$0]  %s979, 128, %s13, [#allocation19]
    $region93: #{tpu_custom_call.1} parent=1 // pred_fallthru
      _
    // Predicated region
    $region94: #{tpu_custom_call.1} parent=1 // pred_check
      _
    $region95: #{tpu_custom_call.1} parent=1 // pred_check_branch
      %983 = sbr.rel (0) target = $region97
    $region96: #{tpu_custom_call.1} parent=1 // pred_region
      %984 = dma.done [#allocation4], 128
    $region97: #{tpu_custom_call.1} parent=1 // pred_fallthru
      _
    // Predicated region
    $region98: #{tpu_custom_call.1} parent=1 // pred_check
      _
    $region99: #{tpu_custom_call.1} parent=1 // pred_check_branch
      %986 = sbr.rel (0) target = $region101
    $region100: #{tpu_custom_call.1} parent=1 // pred_region
      %987 = dma.done [#allocation19], 128
    $region101: #{tpu_custom_call.1} parent=1 // pred_fallthru
      _
    %988 = vsyncpa [#allocation3], 1
    %989 = vsyncpa [#allocation6], 1
    %990 = vsyncpa [#allocation9], 1
    %991 = vsyncpa [#allocation12], 1
    %992 = vsyncpa [#allocation15], 1
    %993 = vsyncpa [#allocation4], 1
    %994 = vsyncpa [#allocation19], 1

</llo_original>
